<compile_context>
chip_gen: v7x
topology: tpu7x:2x2x1
jax: 0.10.0
libtpu: 0.0.40
codegen_flags: <defaults>
</compile_context>

<pallas_src>
import functools

import jax
import jax.numpy as jnp
from jax.experimental import pallas as pl
from jax.experimental.pallas import tpu as pltpu


def _se_kernel(x_ref, w1t_ref, b1_ref, w2t_ref, b2_ref, o_ref, *, inv_hw):
    # x_ref: (Nb, C, HWp)   w1t: (C, Csq)  b1: (1, Csq)
    #                       w2t: (Csq, C)  b2: (1, C)
    x = x_ref[...]                                              # (Nb, C, HWp)

    # adaptive_avg_pool2d -> (1,1): sum over (zero-padded) spatial, / real HW.
    # Accumulate in f32 (matters if I/O dtype is ever switched to bf16).
    pooled = jnp.sum(x.astype(jnp.float32), axis=-1) * inv_hw   # (Nb, C)

    # fc1 (1x1 conv) + SiLU, batched over Nb
    s1 = jnp.dot(pooled, w1t_ref[...],
                 preferred_element_type=jnp.float32) + b1_ref[...]   # (Nb, Csq)
    s1 = s1 * jax.nn.sigmoid(s1)

    # fc2 (1x1 conv) + Sigmoid, batched over Nb
    s2 = jnp.dot(s1, w2t_ref[...],
                 preferred_element_type=jnp.float32) + b2_ref[...]   # (Nb, C)
    scale = jax.nn.sigmoid(s2)                                        # (Nb, C)

    # excite: broadcast per-(image, channel) scale over spatial
    o_ref[...] = x * scale.astype(x.dtype)[:, :, None]


def _pick_nb(n, c, hw, itemsize, target_block_bytes, min_steps=4):
    """Largest Nb dividing n with block <= target and >= min(min_steps, n) steps."""
    per_img = c * hw * itemsize
    cap = max(1, target_block_bytes // per_img)
    want_steps = min(min_steps, n)
    best = 1
    for nb in range(1, n + 1):
        if n % nb:
            continue
        if nb > cap:
            break
        if n // nb >= want_steps:
            best = nb
    return best


def squeeze_excitation(x, w1, b1, w2, b2, *, target_block_bytes=6 << 20):
    """x: (N, C, H, W) float32 NCHW.  w1:(Csq,C) b1:(Csq,) w2:(C,Csq) b2:(C,)."""
    N, C, H, W = x.shape
    HW = H * W
    Csq = w1.shape[0]
    itemsize = jnp.dtype(x.dtype).itemsize

    # Lane-dense spatial: pad HW to a multiple of 128.  Zero pad is exact for
    # the sum-pool (divisor is the true HW) and stays zero through the excite.
    HWp = ((HW + 127) // 128) * 128
    x2 = x.reshape(N, C, HW)
    if HWp != HW:
        x2 = jnp.pad(x2, ((0, 0), (0, 0), (0, HWp - HW)))

    Nb = _pick_nb(N, C, HWp, itemsize, target_block_bytes)

    # Pre-transpose weights so the FCs are (Nb,C)@(C,Csq) and (Nb,Csq)@(Csq,C).
    w1t = jnp.asarray(w1, jnp.float32).T          # (C, Csq)
    w2t = jnp.asarray(w2, jnp.float32).T          # (Csq, C)
    b1r = jnp.asarray(b1, jnp.float32).reshape(1, Csq)
    b2r = jnp.asarray(b2, jnp.float32).reshape(1, C)

    block_bytes = Nb * C * HWp * itemsize
    weight_bytes = 4 * (2 * C * Csq + C + Csq)
    # double-buffered in + out blocks + weights + margin; portable across
    # v5e (16 MiB scoped default), v6e (32 MiB) and v7x (64 MiB physical).
    vmem_limit = int(min(max(4 * block_bytes + 4 * weight_bytes + (2 << 20),
                             32 << 20), 48 << 20))

    kernel = functools.partial(_se_kernel, inv_hw=1.0 / HW)

    out = pl.pallas_call(
        kernel,
        out_shape=jax.ShapeDtypeStruct((N, C, HWp), x.dtype),
        grid_spec=pltpu.PrefetchScalarGridSpec(
            num_scalar_prefetch=0,
            grid=(N // Nb,),
            in_specs=[
                pl.BlockSpec((Nb, C, HWp), lambda i: (i, 0, 0)),
                pl.BlockSpec((C, Csq), lambda i: (0, 0)),
                pl.BlockSpec((1, Csq), lambda i: (0, 0)),
                pl.BlockSpec((Csq, C), lambda i: (0, 0)),
                pl.BlockSpec((1, C), lambda i: (0, 0)),
            ],
            out_specs=pl.BlockSpec((Nb, C, HWp), lambda i: (i, 0, 0)),
        ),
        compiler_params=pltpu.CompilerParams(
            dimension_semantics=("parallel",),
            vmem_limit_bytes=vmem_limit,
        ),
        input_output_aliases={0: 0},     # SE overwrites its activation slab
        cost_estimate=pl.CostEstimate(
            flops=int(4 * N * C * Csq + 2 * N * C * HWp),
            transcendentals=int(N * (C + 2 * Csq)),
            bytes_accessed=int(2 * N * C * HWp * itemsize),
        ),
    )(x2, w1t, b1r, w2t, b2r)

    if HWp != HW:
        out = out[:, :, :HW]
    return out.reshape(N, C, H, W)


def _reference(x, w1, b1, w2, b2):
    pooled = jnp.mean(x, axis=(2, 3), keepdims=True)                 # (N,C,1,1)
    s = jnp.einsum('oc,nchw->nohw', w1, pooled) + b1[None, :, None, None]
    s = s * jax.nn.sigmoid(s)
    s = jnp.einsum('oc,nchw->nohw', w2, s) + b2[None, :, None, None]
    s = jax.nn.sigmoid(s)
    return s * x


if __name__ == "__main__":
    # Module config: input_c=16, expand_c=32, squeeze_factor=4 -> squeeze_c=4
    input_c, expand_c, squeeze_factor = 16, 32, 4
    squeeze_c = input_c // squeeze_factor

    key = jax.random.PRNGKey(0)
    kx, k1, k2, k3, k4, kx2 = jax.random.split(key, 6)
    # Conv2d(expand_c, squeeze_c, 1) weight (out,in,1,1) flattened to (out,in)
    w1 = jax.random.normal(k1, (squeeze_c, expand_c), dtype=jnp.float32) * 0.1
    b1 = jax.random.normal(k2, (squeeze_c,), dtype=jnp.float32) * 0.1
    # Conv2d(squeeze_c, expand_c, 1)
    w2 = jax.random.normal(k3, (expand_c, squeeze_c), dtype=jnp.float32) * 0.1
    b2 = jax.random.normal(k4, (expand_c,), dtype=jnp.float32) * 0.1

    # Test 1: lane-aligned spatial (HW = 256), tiny batch.
    x = jax.random.normal(kx, (2, expand_c, 16, 16), dtype=jnp.float32)
    out = squeeze_excitation(x, w1, b1, w2, b2)
    jax.block_until_ready(out)
    ref = _reference(x, w1, b1, w2, b2)
    assert out.shape == x.shape and out.dtype == x.dtype
    assert jnp.max(jnp.abs(out - ref)) < 1e-5

    # Test 2: realistic EfficientNet spatial (7x7 -> HW=49, padded to 128)
    # with a batch large enough to exercise Nb > 1 blocking.
    xb = jax.random.normal(kx2, (8, expand_c, 7, 7), dtype=jnp.float32)
    outb = squeeze_excitation(xb, w1, b1, w2, b2)
    jax.block_until_ready(outb)
    refb = _reference(xb, w1, b1, w2, b2)
    assert outb.shape == xb.shape and outb.dtype == xb.dtype
    assert jnp.max(jnp.abs(outb - refb)) < 1e-5

    print("KERNEL_OK")
</pallas_src>

<mosaic_0001>
module attributes {stable_mosaic.version = 11 : i64} {
  func.func @_se_kernel(%arg0: i32, %arg1: memref<1x32x256xf32, #tpu.memory_space<vmem>>, %arg2: memref<32x4xf32, #tpu.memory_space<vmem>>, %arg3: memref<1x4xf32, #tpu.memory_space<vmem>>, %arg4: memref<4x32xf32, #tpu.memory_space<vmem>>, %arg5: memref<1x32xf32, #tpu.memory_space<vmem>>, %arg6: memref<1x32x256xf32, #tpu.memory_space<vmem>>) attributes {dimension_semantics = [#tpu.dimension_semantics<parallel>], iteration_bounds = array<i64: 2>, scalar_prefetch = 0 : i64, scratch_operands = 0 : i64, tpu.core_type = #tpu.core_type<tc>, window_params = [{transform_indices = @transform_0, window_bounds = array<i64: 1, 32, 256>}, {pipeline_mode = #tpu.pipeline_mode<synchronous>, transform_indices = @transform_1, window_bounds = array<i64: 32, 4>}, {pipeline_mode = #tpu.pipeline_mode<synchronous>, transform_indices = @transform_2, window_bounds = array<i64: 1, 4>}, {pipeline_mode = #tpu.pipeline_mode<synchronous>, transform_indices = @transform_3, window_bounds = array<i64: 4, 32>}, {pipeline_mode = #tpu.pipeline_mode<synchronous>, transform_indices = @transform_4, window_bounds = array<i64: 1, 32>}, {transform_indices = @transform_5, window_bounds = array<i64: 1, 32, 256>}]} {
    %c0 = arith.constant 0 : index
    %c0_0 = arith.constant 0 : index
    %c0_1 = arith.constant 0 : index
    %0 = vector.load %arg1[%c0, %c0_0, %c0_1] : memref<1x32x256xf32, #tpu.memory_space<vmem>>, vector<1x32x256xf32>
    %cst = arith.constant dense<0.000000e+00> : vector<1x32xf32>
    %1 = vector.multi_reduction <add>, %0, %cst [2] : vector<1x32x256xf32> to vector<1x32xf32>
    %cst_2 = arith.constant 3.906250e-03 : f32
    %2 = vector.broadcast %cst_2 : f32 to vector<1x32xf32>
    %3 = arith.mulf %1, %2 : vector<1x32xf32>
    %c0_3 = arith.constant 0 : index
    %c0_4 = arith.constant 0 : index
    %4 = vector.load %arg2[%c0_3, %c0_4] : memref<32x4xf32, #tpu.memory_space<vmem>>, vector<32x4xf32>
    %cst_5 = arith.constant dense<0.000000e+00> : vector<1x4xf32>
    %5 = tpu.matmul %3, %4, %cst_5 {dimension_numbers = #tpu.dot_dimension_numbers<[1], [0], [0], [1], [0, 0, 1, 1], [], []>} : vector<1x32xf32>, vector<32x4xf32>, vector<1x4xf32> -> vector<1x4xf32>
    %c0_6 = arith.constant 0 : index
    %c0_7 = arith.constant 0 : index
    %6 = vector.load %arg3[%c0_6, %c0_7] : memref<1x4xf32, #tpu.memory_space<vmem>>, vector<1x4xf32>
    %7 = arith.addf %5, %6 : vector<1x4xf32>
    %8 = arith.negf %7 : vector<1x4xf32>
    %9 = math.exp %8 : vector<1x4xf32>
    %cst_8 = arith.constant 1.000000e+00 : f32
    %10 = vector.broadcast %cst_8 : f32 to vector<1x4xf32>
    %11 = arith.addf %10, %9 : vector<1x4xf32>
    %12 = arith.divf %10, %11 : vector<1x4xf32>
    %13 = arith.mulf %7, %12 : vector<1x4xf32>
    %c0_9 = arith.constant 0 : index
    %c0_10 = arith.constant 0 : index
    %14 = vector.load %arg4[%c0_9, %c0_10] : memref<4x32xf32, #tpu.memory_space<vmem>>, vector<4x32xf32>
    %cst_11 = arith.constant dense<0.000000e+00> : vector<1x32xf32>
    %15 = tpu.matmul %13, %14, %cst_11 {dimension_numbers = #tpu.dot_dimension_numbers<[1], [0], [0], [1], [0, 0, 1, 1], [], []>} : vector<1x4xf32>, vector<4x32xf32>, vector<1x32xf32> -> vector<1x32xf32>
    %c0_12 = arith.constant 0 : index
    %c0_13 = arith.constant 0 : index
    %16 = vector.load %arg5[%c0_12, %c0_13] : memref<1x32xf32, #tpu.memory_space<vmem>>, vector<1x32xf32>
    %17 = arith.addf %15, %16 : vector<1x32xf32>
    %18 = arith.negf %17 : vector<1x32xf32>
    %19 = math.exp %18 : vector<1x32xf32>
    %cst_14 = arith.constant 1.000000e+00 : f32
    %20 = vector.broadcast %cst_14 : f32 to vector<1x32xf32>
    %21 = arith.addf %20, %19 : vector<1x32xf32>
    %22 = arith.divf %20, %21 : vector<1x32xf32>
    %23 = vector.shape_cast %22 : vector<1x32xf32> to vector<1x32x1xf32>
    %24 = vector.broadcast %23 : vector<1x32x1xf32> to vector<1x32x256xf32>
    %25 = arith.mulf %0, %24 : vector<1x32x256xf32>
    %c0_15 = arith.constant 0 : index
    %c0_16 = arith.constant 0 : index
    %c0_17 = arith.constant 0 : index
    %26 = vector.load %arg6[%c0_15, %c0_16, %c0_17] : memref<1x32x256xf32, #tpu.memory_space<vmem>>, vector<1x32x256xf32>
    tpu.vector_store %arg6[%c0_15, %c0_16, %c0_17], %25 {strides = array<i32>} : memref<1x32x256xf32, #tpu.memory_space<vmem>>, vector<1x32x256xf32>,
    return
  }
  func.func @transform_0(%arg0: i32) -> (i32, i32, i32) {
    %c0_i32 = arith.constant 0 : i32
    %c0_i32_0 = arith.constant 0 : i32
    %c0_i32_1 = arith.constant 0 : i32
    return %arg0, %c0_i32, %c0_i32_0 : i32, i32, i32
  }
  func.func @transform_1(%arg0: i32) -> (i32, i32) {
    %c0_i32 = arith.constant 0 : i32
    %c0_i32_0 = arith.constant 0 : i32
    %c0_i32_1 = arith.constant 0 : i32
    return %c0_i32, %c0_i32_0 : i32, i32
  }
  func.func @transform_2(%arg0: i32) -> (i32, i32) {
    %c0_i32 = arith.constant 0 : i32
    %c0_i32_0 = arith.constant 0 : i32
    %c0_i32_1 = arith.constant 0 : i32
    return %c0_i32, %c0_i32_0 : i32, i32
  }
  func.func @transform_3(%arg0: i32) -> (i32, i32) {
    %c0_i32 = arith.constant 0 : i32
    %c0_i32_0 = arith.constant 0 : i32
    %c0_i32_1 = arith.constant 0 : i32
    return %c0_i32, %c0_i32_0 : i32, i32
  }
  func.func @transform_4(%arg0: i32) -> (i32, i32) {
    %c0_i32 = arith.constant 0 : i32
    %c0_i32_0 = arith.constant 0 : i32
    %c0_i32_1 = arith.constant 0 : i32
    return %c0_i32, %c0_i32_0 : i32, i32
  }
  func.func @transform_5(%arg0: i32) -> (i32, i32, i32) {
    %c0_i32 = arith.constant 0 : i32
    %c0_i32_0 = arith.constant 0 : i32
    %c0_i32_1 = arith.constant 0 : i32
    return %arg0, %c0_i32, %c0_i32_0 : i32, i32, i32
  }
}

</mosaic_0001>

<llo_original>
// kernel: tpu_custom_call.1
$region0: #{tpu_custom_call.1}
  #allocation0 [shape = 'u32[]', space=smem, size = 0x4, offset = 0x4, fixed_abs, tag = 'smem constant byte address 0x4 - core index']
  #allocation1 [shape = 'u32[144,128]{1,0:T(1,128)}', space=vmem, size = 0x12000, scoped, tag = 'internal scratch']
  %s0 = inlined_call_operand.hbm [shape: f32[2,32,256], index: 0, kind: input, shape index: {}, may-alias: {0,5}]
  %s1 = inlined_call_operand.vmem [shape: f32[32,4], index: 1, kind: input, shape index: {}]
  %s2 = inlined_call_operand.vmem [shape: f32[1,4], index: 2, kind: input, shape index: {}]
  %s3 = inlined_call_operand.vmem [shape: f32[4,32], index: 3, kind: input, shape index: {}]
  %s4 = inlined_call_operand.vmem [shape: f32[1,32], index: 4, kind: input, shape index: {}]
  %s5 = inlined_call_operand.hbm [shape: f32[2,32,256], index: 5, kind: output, shape index: {}, may-alias: {0,5}]
  %s6 = sld [smem:[#allocation0]]
  $region57: #{tpu_custom_call.1} parent=0
    _
  %s8 = ssub.s32 1, %s6
  %s9 = scalar_select 0, %s8, %s6
  $region1: #{tpu_custom_call.1} parent=0
    #allocation2 [shape = 'u8[65536]{0}', space=vmem, size = 0x10000, scoped, tag = 'input window, operand 0']
    #allocation3 [shape = 's32[2]{0}', space=sflag, size = 0x8, scoped, tag = 'scoped memory for tpu_custom_call.1']
    #allocation4 [shape = 's32[2]{0}', space=sflag, size = 0x8, scoped, tag = 'scoped memory for tpu_custom_call.1']
    #allocation5 [shape = 'u8[65536]{0}', space=vmem, size = 0x10000, scoped, tag = 'output window, operand 0']
    %10 = vsyncpa [#allocation3], 0
    %s11 = scalar_lea.sflag [#allocation3], 1
    %12 = vsyncpa %s11, 0
    %13 = vsyncpa [#allocation4], 0
    %s14 = scalar_lea.sflag [#allocation4], 1
    %15 = vsyncpa %s14, 0
    loop: start=0, step=1, limit=4
    $region2: #{tpu_custom_call.1} parent=1 // loop_pre_header
      _
    $region3: #{tpu_custom_call.1} parent=1 // loop_header
      %s17 = sphi 0, %s21
      %p18 = scmp.ge.s32.totalorder %s17, 4
      %s27 = sphi 0, %s29
      %s30 = sphi 0, %s27
      %s31 = sphi 0, %s30
      %s47 = sphi 0, %s31
      %s51 = sphi 0, %s51
      %s53 = sphi 0, %s51
      %s54 = sphi 0, %s53
      %s68 = sphi 0, %s54
      %s72 = sphi 0, %s72
      %s74 = sphi 0, %s72
      %s75 = sphi 0, %s74
      %s89 = sphi 0, %s75
      %s93 = sphi 0, %s93
      %s95 = sphi 0, %s93
      %s96 = sphi 0, %s95
      %s110 = sphi 0, %s96
      %s114 = sphi 0, %s114
      %s116 = sphi 0, %s114
      %s117 = sphi 0, %s116
      %s131 = sphi 0, %s117
      %s137 = sphi 0, %s139
      %s140 = sphi 0, %s137
      %s141 = sphi 0, %s140
      %s157 = sphi 0, %s141
    $region4: #{tpu_custom_call.1} parent=1 // loop_header_branch
      %20 = sbr.rel (%p18) target = $region8
    $region5: #{tpu_custom_call.1} parent=1 // loop_body
      %s22 = ssub.s32 %s17, 1
      %s23 = ssub.s32 %s17, 2
      %s24 = sadd.s32 %s17, 1
      %s25 = ssub.s32 %s17, %s24
      %p26 = scmp.eq.s32.totalorder %s25, 0
      %s28 = sadd.s32 %s27, 1
      %s29 = scalar_select %p26, %s27, %s28
      %p32 = pneg %p26
      %p33 = scmp.eq.s32.totalorder %s17, 1
      %p34 = por %p32, %p33
      %p35 = scmp.ne.s32.totalorder %s27, %s30
      %p36 = scmp.eq.s32.totalorder %s17, 0
      %p37 = por %p35, %p36
      %p38 = scmp.ne.s32.totalorder %s27, %s30
      %p39 = scmp.eq.s32.totalorder %s22, 1
      %p40 = por %p38, %p39
      %p41 = scmp.ne.s32.totalorder %s30, %s31
      %p42 = scmp.eq.s32.totalorder %s22, 0
      %p43 = por %p41, %p42
      %p44 = scmp.ne.s32.totalorder %s30, %s31
      %p45 = scmp.eq.s32.totalorder %s23, 1
      %p46 = por %p44, %p45
      %p48 = scmp.ne.s32.totalorder %s31, %s47
      %p49 = scmp.eq.s32.totalorder %s23, 0
      %p50 = por %p48, %p49
      %s52 = sadd.s32 %s51, 1
      %p55 = scmp.eq.s32.totalorder %s17, 1
      %p56 = scmp.ne.s32.totalorder %s51, %s53
      %p57 = scmp.eq.s32.totalorder %s17, 0
      %p58 = por %p56, %p57
      %p59 = scmp.ne.s32.totalorder %s51, %s53
      %p60 = scmp.eq.s32.totalorder %s22, 1
      %p61 = por %p59, %p60
      %p62 = scmp.ne.s32.totalorder %s53, %s54
      %p63 = scmp.eq.s32.totalorder %s22, 0
      %p64 = por %p62, %p63
      %p65 = scmp.ne.s32.totalorder %s53, %s54
      %p66 = scmp.eq.s32.totalorder %s23, 1
      %p67 = por %p65, %p66
      %p69 = scmp.ne.s32.totalorder %s54, %s68
      %p70 = scmp.eq.s32.totalorder %s23, 0
      %p71 = por %p69, %p70
      %s73 = sadd.s32 %s72, 1
      %p76 = scmp.eq.s32.totalorder %s17, 1
      %p77 = scmp.ne.s32.totalorder %s72, %s74
      %p78 = scmp.eq.s32.totalorder %s17, 0
      %p79 = por %p77, %p78
      %p80 = scmp.ne.s32.totalorder %s72, %s74
      %p81 = scmp.eq.s32.totalorder %s22, 1
      %p82 = por %p80, %p81
      %p83 = scmp.ne.s32.totalorder %s74, %s75
      %p84 = scmp.eq.s32.totalorder %s22, 0
      %p85 = por %p83, %p84
      %p86 = scmp.ne.s32.totalorder %s74, %s75
      %p87 = scmp.eq.s32.totalorder %s23, 1
      %p88 = por %p86, %p87
      %p90 = scmp.ne.s32.totalorder %s75, %s89
      %p91 = scmp.eq.s32.totalorder %s23, 0
      %p92 = por %p90, %p91
      %s94 = sadd.s32 %s93, 1
      %p97 = scmp.eq.s32.totalorder %s17, 1
      %p98 = scmp.ne.s32.totalorder %s93, %s95
      %p99 = scmp.eq.s32.totalorder %s17, 0
      %p100 = por %p98, %p99
      %p101 = scmp.ne.s32.totalorder %s93, %s95
      %p102 = scmp.eq.s32.totalorder %s22, 1
      %p103 = por %p101, %p102
      %p104 = scmp.ne.s32.totalorder %s95, %s96
      %p105 = scmp.eq.s32.totalorder %s22, 0
      %p106 = por %p104, %p105
      %p107 = scmp.ne.s32.totalorder %s95, %s96
      %p108 = scmp.eq.s32.totalorder %s23, 1
      %p109 = por %p107, %p108
      %p111 = scmp.ne.s32.totalorder %s96, %s110
      %p112 = scmp.eq.s32.totalorder %s23, 0
      %p113 = por %p111, %p112
      %s115 = sadd.s32 %s114, 1
      %p118 = scmp.eq.s32.totalorder %s17, 1
      %p119 = scmp.ne.s32.totalorder %s114, %s116
      %p120 = scmp.eq.s32.totalorder %s17, 0
      %p121 = por %p119, %p120
      %p122 = scmp.ne.s32.totalorder %s114, %s116
      %p123 = scmp.eq.s32.totalorder %s22, 1
      %p124 = por %p122, %p123
      %p125 = scmp.ne.s32.totalorder %s116, %s117
      %p126 = scmp.eq.s32.totalorder %s22, 0
      %p127 = por %p125, %p126
      %p128 = scmp.ne.s32.totalorder %s116, %s117
      %p129 = scmp.eq.s32.totalorder %s23, 1
      %p130 = por %p128, %p129
      %p132 = scmp.ne.s32.totalorder %s117, %s131
      %p133 = scmp.eq.s32.totalorder %s23, 0
      %p134 = por %p132, %p133
      %s135 = ssub.s32 %s17, %s24
      %p136 = scmp.eq.s32.totalorder %s135, 0
      %s138 = sadd.s32 %s137, 1
      %s139 = scalar_select %p136, %s137, %s138
      %p142 = pneg %p136
      %p143 = scmp.eq.s32.totalorder %s17, 1
      %p144 = por %p142, %p143
      %p145 = scmp.ne.s32.totalorder %s137, %s140
      %p146 = scmp.eq.s32.totalorder %s17, 0
      %p147 = por %p145, %p146
      %p148 = scmp.ne.s32.totalorder %s137, %s140
      %p149 = scmp.eq.s32.totalorder %s22, 1
      %p150 = por %p148, %p149
      %p151 = scmp.ne.s32.totalorder %s140, %s141
      %p152 = scmp.eq.s32.totalorder %s22, 0
      %p153 = por %p151, %p152
      %p154 = scmp.ne.s32.totalorder %s140, %s141
      %p155 = scmp.eq.s32.totalorder %s23, 1
      %p156 = por %p154, %p155
      %p158 = scmp.ne.s32.totalorder %s141, %s157
      %p159 = scmp.eq.s32.totalorder %s23, 0
      %p160 = por %p158, %p159
      %p161 = scmp.le.s32.totalorder 1, %s17
      %p162 = scmp.lt.s32.totalorder %s17, 3
      %p163 = pnand %p161, %p162
      %p164 = pneg %p163
      // Predicated region
      $region9: #{tpu_custom_call.1} parent=5 // pred_check
        _
      $region10: #{tpu_custom_call.1} parent=5 // pred_check_branch
        %166 = sbr.rel (%p163) target = $region12
      $region11: #{tpu_custom_call.1} parent=5 // pred_region
        %s167 = ssub.s32 %s17, 1
        // Predicated region
        $region13: #{tpu_custom_call.1} parent=11 // pred_check
          %p168 = pneg %p64
        $region14: #{tpu_custom_call.1} parent=11 // pred_check_branch
          %170 = sbr.rel (%p168) target = $region16
        $region15: #{tpu_custom_call.1} parent=11 // pred_region
          _
        $region16: #{tpu_custom_call.1} parent=11 // pred_fallthru
          _
        // Predicated region
        $region17: #{tpu_custom_call.1} parent=11 // pred_check
          %p171 = pneg %p85
        $region18: #{tpu_custom_call.1} parent=11 // pred_check_branch
          %173 = sbr.rel (%p171) target = $region20
        $region19: #{tpu_custom_call.1} parent=11 // pred_region
          _
        $region20: #{tpu_custom_call.1} parent=11 // pred_fallthru
          _
        // Predicated region
        $region21: #{tpu_custom_call.1} parent=11 // pred_check
          %p174 = pneg %p106
        $region22: #{tpu_custom_call.1} parent=11 // pred_check_branch
          %176 = sbr.rel (%p174) target = $region24
        $region23: #{tpu_custom_call.1} parent=11 // pred_region
          _
        $region24: #{tpu_custom_call.1} parent=11 // pred_fallthru
          _
        // Predicated region
        $region25: #{tpu_custom_call.1} parent=11 // pred_check
          %p177 = pneg %p127
        $region26: #{tpu_custom_call.1} parent=11 // pred_check_branch
          %179 = sbr.rel (%p177) target = $region28
        $region27: #{tpu_custom_call.1} parent=11 // pred_region
          _
        $region28: #{tpu_custom_call.1} parent=11 // pred_fallthru
          _
      $region12: #{tpu_custom_call.1} parent=5 // pred_fallthru
        _
      %p180 = scmp.lt.s32.totalorder %s17, 2
      // Predicated region
      $region29: #{tpu_custom_call.1} parent=5 // pred_check
        %p181 = pneg %p180
      $region30: #{tpu_custom_call.1} parent=5 // pred_check_branch
        %183 = sbr.rel (%p181) target = $region32
      $region31: #{tpu_custom_call.1} parent=5 // pred_region
        // Predicated region
        $region33: #{tpu_custom_call.1} parent=31 // pred_check
          %p184 = pneg %p37
        $region34: #{tpu_custom_call.1} parent=31 // pred_check_branch
          %186 = sbr.rel (%p184) target = $region36
        $region35: #{tpu_custom_call.1} parent=31 // pred_region
          %s187 = sand.u32 %s27, 1
          %s188 = scalar_lea.sflag [#allocation3], %s187
          %s189 = sand.u32 %s27, 1
          %s190 = smul.addr %s189, 64
          %s191 = scalar_lea.vmem [#allocation2], %s190
          %s193 = ssub.s32 1024, 1024
          %194 = vsyncadd %s188, %s193
          %s195 = smul.addr %s17, 8
          %s196 = smul.addr %s195, 128
          %s197 = scalar_lea.hbm %s0, %s196
          %s198 = sshll.u32 %s191, 4
          %s199 = int_to_ptr.vmem [resolvable:$true] %s198
          %204 = dma.hbm_to_vmem [thread:$0]  %s197, 1024, %s199, %s188, 256, 256, 16
        $region36: #{tpu_custom_call.1} parent=31 // pred_fallthru
          _
      $region32: #{tpu_custom_call.1} parent=5 // pred_fallthru
        _
      %p205 = scmp.le.s32.totalorder 1, %s17
      %p206 = scmp.lt.s32.totalorder %s17, 3
      %p207 = pnand %p205, %p206
      %p208 = pneg %p207
      // Predicated region
      $region37: #{tpu_custom_call.1} parent=5 // pred_check
        _
      $region38: #{tpu_custom_call.1} parent=5 // pred_check_branch
        %210 = sbr.rel (%p207) target = $region40
      $region39: #{tpu_custom_call.1} parent=5 // pred_region
        %s211 = ssub.s32 %s17, 1
        %s212 = sand.u32 %s30, 1
        %s213 = scalar_lea.sflag [#allocation3], %s212
        %s214 = sand.u32 %s30, 1
        %s215 = smul.addr %s214, 64
        %s216 = scalar_lea.vmem [#allocation2], %s215
        // Predicated region
        $region41: #{tpu_custom_call.1} parent=39 // pred_check
          %p217 = pneg %p43
        $region42: #{tpu_custom_call.1} parent=39 // pred_check_branch
          %219 = sbr.rel (%p217) target = $region44
        $region43: #{tpu_custom_call.1} parent=39 // pred_region
          %220 = dma.done %s213, 1024
        $region44: #{tpu_custom_call.1} parent=39 // pred_fallthru
          _
        %s221 = sand.u32 %s30, 1
        %s222 = scalar_lea.sflag [#allocation3], %s221
        %s223 = sand.u32 %s30, 1
        %s224 = smul.addr %s223, 64
        %s225 = scalar_lea.vmem [#allocation2], %s224
        %p226 = pneg %p43
        %p227 = pneg %p40
        %p228 = pneg %p64
        %p229 = pneg %p61
        %p230 = pneg %p85
        %p231 = pneg %p82
        %p232 = pneg %p106
        %p233 = pneg %p103
        %p234 = pneg %p127
        %p235 = pneg %p124
        %p236 = pneg %p153
        %p237 = pneg %p150
        %s238 = sand.u32 %s140, 1
        %s239 = scalar_lea.sflag [#allocation4], %s238
        %s240 = sand.u32 %s140, 1
        %s241 = smul.addr %s240, 64
        %s242 = scalar_lea.vmem [#allocation5], %s241
        %v243 = vld [vmem:[%s216] sm:$0xff]
        %v244 = vld [vmem:[%s216 + $0x8] sm:$0xff]
        %v245 = vld [vmem:[%s216 + $0x10] sm:$0xff]
        %v246 = vld [vmem:[%s216 + $0x18] sm:$0xff]
        %v247 = vld [vmem:[%s216 + $0x20] sm:$0xff]
        %v248 = vld [vmem:[%s216 + $0x28] sm:$0xff]
        %v249 = vld [vmem:[%s216 + $0x30] sm:$0xff]
        %v250 = vld [vmem:[%s216 + $0x38] sm:$0xff]
        %v251 = vadd.f32 %v243, %v244
        %252 = vadd.xlane.f32.xlu0 %v251
        %v253 = vpop.xlane.xlu0 %252
        %v254 = vadd.f32 %v245, %v246
        %255 = vadd.xlane.f32.xlu0 %v254
        %v256 = vpop.xlane.xlu0 %255
        %v257 = vadd.f32 %v247, %v248
        %258 = vadd.xlane.f32.xlu0 %v257
        %v259 = vpop.xlane.xlu0 %258
        %v260 = vadd.f32 %v249, %v250
        %261 = vadd.xlane.f32.xlu0 %v260
        %v262 = vpop.xlane.xlu0 %261
        %v263 = vmul.f32 %v253, 0.00390625
        %v264 = vmul.f32 %v256, 0.00390625
        %v265 = vmul.f32 %v259, 0.00390625
        %v266 = vmul.f32 %v262, 0.00390625
        %v267 = vld [vmem:[%s1] sm:$0xff]
        %v268 = vld [vmem:[%s1 + $0x8] sm:$0xff]
        %v269 = vld [vmem:[%s1 + $0x10] sm:$0xff]
        %v270 = vld [vmem:[%s1 + $0x18] sm:$0xff]
        %v271 = vld [vmem:[%s2] sm:$0x1]
        %v276 = vlaneseq
        %v277 = vand.u32 %v276, 127
        %v278 = vlaneseq
        %v279 = vshrl.u32 %v278, 7
        %v280 = vsub.s32 %v277, %v279
        %v281 = vrot.slane %v263, %v280
        %v282 = vadd.s32 %v277, 4294967288
        %v283 = vlaneseq
        %v284 = vshrl.u32 %v283, 7
        %v285 = vsub.s32 %v282, %v284
        %v286 = vrot.slane %v264, %v285
        %vm287 = vcmask 130112
        %v288 = vsel %vm287, %v286, %v281
        %v289 = vadd.s32 %v277, 4294967280
        %v290 = vlaneseq
        %v291 = vshrl.u32 %v290, 7
        %v292 = vsub.s32 %v289, %v291
        %v293 = vrot.slane %v265, %v292
        %vm294 = vcmask 195712
        %v295 = vsel %vm294, %v293, %v288
        %v296 = vadd.s32 %v277, 4294967272
        %v297 = vlaneseq
        %v298 = vshrl.u32 %v297, 7
        %v299 = vsub.s32 %v296, %v298
        %v300 = vrot.slane %v266, %v299
        %vm301 = vcmask 261312
        %v302 = vsel %vm301, %v300, %v295
        %vm303 = vcmask 261120
        %v304 = vsel %vm303, %v302, 0
        %306 = vmatprep.subr.mxu0 0.0
        %307 = vmatpush1.msra.mxu0 %v267
        %308 = vmatprep.subr.mxu0 0.0
        %309 = vmatpush1.msra.mxu0 %v268
        %310 = vmatprep.subr.mxu0 0.0
        %311 = vmatpush1.msra.mxu0 %v269
        %312 = vmatprep.subr.mxu0 0.0
        %313 = vmatpush1.msra.mxu0 %v270
        %314 = vmatprep.subr.mxu0 0.0
        %315 = vmatpush1.msra.mxu0 0.0
        %316 = vmatprep.subr.mxu0 0.0
        %317 = vmatpush1.msra.mxu0 0.0
        %318 = vmatprep.subr.mxu0 0.0
        %319 = vmatpush1.msra.mxu0 0.0
        %320 = vmatprep.subr.mxu0 0.0
        %321 = vmatpush1.msra.mxu0 0.0
        %322 = vmatprep.subr.mxu0 0.0
        %323 = vmatpush1.msra.mxu0 0.0
        %324 = vmatprep.subr.mxu0 0.0
        %325 = vmatpush1.msra.mxu0 0.0
        %326 = vmatprep.subr.mxu0 0.0
        %327 = vmatpush1.msra.mxu0 0.0
        %328 = vmatprep.subr.mxu0 0.0
        %329 = vmatpush1.msra.mxu0 0.0
        %330 = vmatprep.subr.mxu0 0.0
        %331 = vmatpush1.msra.mxu0 0.0
        %332 = vmatprep.subr.mxu0 0.0
        %333 = vmatpush1.msra.mxu0 0.0
        %334 = vmatprep.subr.mxu0 0.0
        %335 = vmatpush1.msra.mxu0 0.0
        %336 = vmatprep.subr.mxu0 0.0
        %337 = vmatpush1.msra.mxu0 0.0
        %338 = vmatprep.subr.mxu0 0.0
        %339 = vmatpush1.msra.mxu0 0.0
        %340 = vmatprep.subr.mxu0 0.0
        %341 = vmatpush1.msra.mxu0 0.0
        %342 = vmatprep.subr.mxu0 0.0
        %343 = vmatpush1.msra.mxu0 0.0
        %344 = vmatprep.subr.mxu0 0.0
        %345 = vmatpush1.msra.mxu0 0.0
        %346 = vmatprep.subr.mxu0 0.0
        %347 = vmatpush1.msra.mxu0 0.0
        %348 = vmatprep.subr.mxu0 0.0
        %349 = vmatpush1.msra.mxu0 0.0
        %350 = vmatprep.subr.mxu0 0.0
        %351 = vmatpush1.msra.mxu0 0.0
        %352 = vmatprep.subr.mxu0 0.0
        %353 = vmatpush1.msra.mxu0 0.0
        %354 = vmatprep.subr.mxu0 0.0
        %355 = vmatpush1.msra.mxu0 0.0
        %356 = vmatprep.subr.mxu0 0.0
        %357 = vmatpush1.msra.mxu0 0.0
        %358 = vmatprep.subr.mxu0 0.0
        %359 = vmatpush1.msra.mxu0 0.0
        %360 = vmatprep.subr.mxu0 0.0
        %361 = vmatpush1.msra.mxu0 0.0
        %362 = vmatprep.subr.mxu0 0.0
        %363 = vmatpush1.msra.mxu0 0.0
        %364 = vmatprep.subr.mxu0 0.0
        %365 = vmatpush1.msra.mxu0 0.0
        %366 = vmatprep.subr.mxu0 0.0
        %367 = vmatpush1.msra.mxu0 0.0
        %368 = vmatprep.subr.mxu0 0.0
        %369 = vmatpush1.msra.mxu0 0.0
        %370 = vmatprep.mubr.f32.mxu0 0.0
        %371 = vmatmul.mubr.f32.gmra.mrb[0].mxu0 %v304
        %v372 = vpop.f32.mrb[0].mxu0
        %v373 = vadd.f32 %v271, %v372
        %v374 = vpop.f32.mrb[0].mxu0
        %375 = vdwg.mxu0
        %v376 = vxor.u32 %v373, 2147483648
        %v377 = vmul.f32 %v376, 1.442695
        %v378 = vpow.pop %v377
        %v379 = vadd.f32 %v378, 1.0
        %v380 = vrcp.pop %v379
        %v381 = vmul.f32 1.0, %v380
        %v382 = vmul.f32 %v373, %v381
        %v383 = vld [vmem:[%s3] sm:$0xf]
        %v384 = vld [vmem:[%s4] sm:$0x1]
        %vm385 = vcmask 31744
        %v387 = vsel %vm385, %v382, 0
        %vm389 = vcmask 1043456
        %v391 = vsel %vm389, %v383, 0
        %393 = vmatprep.subr.mxu0 0.0
        %394 = vmatpush1.msra.mxu0 %v391
        %395 = vmatprep.subr.mxu0 0.0
        %396 = vmatpush1.msra.mxu0 0.0
        %397 = vmatprep.subr.mxu0 0.0
        %398 = vmatpush1.msra.mxu0 0.0
        %399 = vmatprep.subr.mxu0 0.0
        %400 = vmatpush1.msra.mxu0 0.0
        %401 = vmatprep.subr.mxu0 0.0
        %402 = vmatpush1.msra.mxu0 0.0
        %403 = vmatprep.subr.mxu0 0.0
        %404 = vmatpush1.msra.mxu0 0.0
        %405 = vmatprep.subr.mxu0 0.0
        %406 = vmatpush1.msra.mxu0 0.0
        %407 = vmatprep.subr.mxu0 0.0
        %408 = vmatpush1.msra.mxu0 0.0
        %409 = vmatprep.subr.mxu0 0.0
        %410 = vmatpush1.msra.mxu0 0.0
        %411 = vmatprep.subr.mxu0 0.0
        %412 = vmatpush1.msra.mxu0 0.0
        %413 = vmatprep.subr.mxu0 0.0
        %414 = vmatpush1.msra.mxu0 0.0
        %415 = vmatprep.subr.mxu0 0.0
        %416 = vmatpush1.msra.mxu0 0.0
        %417 = vmatprep.subr.mxu0 0.0
        %418 = vmatpush1.msra.mxu0 0.0
        %419 = vmatprep.subr.mxu0 0.0
        %420 = vmatpush1.msra.mxu0 0.0
        %421 = vmatprep.subr.mxu0 0.0
        %422 = vmatpush1.msra.mxu0 0.0
        %423 = vmatprep.subr.mxu0 0.0
        %424 = vmatpush1.msra.mxu0 0.0
        %425 = vmatprep.subr.mxu0 0.0
        %426 = vmatpush1.msra.mxu0 0.0
        %427 = vmatprep.subr.mxu0 0.0
        %428 = vmatpush1.msra.mxu0 0.0
        %429 = vmatprep.subr.mxu0 0.0
        %430 = vmatpush1.msra.mxu0 0.0
        %431 = vmatprep.subr.mxu0 0.0
        %432 = vmatpush1.msra.mxu0 0.0
        %433 = vmatprep.subr.mxu0 0.0
        %434 = vmatpush1.msra.mxu0 0.0
        %435 = vmatprep.subr.mxu0 0.0
        %436 = vmatpush1.msra.mxu0 0.0
        %437 = vmatprep.subr.mxu0 0.0
        %438 = vmatpush1.msra.mxu0 0.0
        %439 = vmatprep.subr.mxu0 0.0
        %440 = vmatpush1.msra.mxu0 0.0
        %441 = vmatprep.subr.mxu0 0.0
        %442 = vmatpush1.msra.mxu0 0.0
        %443 = vmatprep.subr.mxu0 0.0
        %444 = vmatpush1.msra.mxu0 0.0
        %445 = vmatprep.subr.mxu0 0.0
        %446 = vmatpush1.msra.mxu0 0.0
        %447 = vmatprep.subr.mxu0 0.0
        %448 = vmatpush1.msra.mxu0 0.0
        %449 = vmatprep.subr.mxu0 0.0
        %450 = vmatpush1.msra.mxu0 0.0
        %451 = vmatprep.subr.mxu0 0.0
        %452 = vmatpush1.msra.mxu0 0.0
        %453 = vmatprep.subr.mxu0 0.0
        %454 = vmatpush1.msra.mxu0 0.0
        %455 = vmatprep.subr.mxu0 0.0
        %456 = vmatpush1.msra.mxu0 0.0
        %457 = vmatprep.mubr.f32.mxu0 0.0
        %458 = vmatmul.mubr.f32.gmra.mrb[0].mxu0 %v387
        %v459 = vpop.f32.mrb[0].mxu0
        %v460 = vadd.f32 %v384, %v459
        %v461 = vpop.f32.mrb[0].mxu0
        %462 = vdwg.mxu0
        %v463 = vxor.u32 %v460, 2147483648
        %v464 = vmul.f32 %v463, 1.442695
        %v465 = vpow.pop %v464
        %v466 = vadd.f32 %v465, 1.0
        %v467 = vrcp.pop %v466
        %v468 = vmul.f32 1.0, %v467
        %v469 = vlaneseq
        %v470 = vshrl.u32 %v469, 7
        %v471 = vsub.s32 0, %v470
        %v472 = vrot.slane %v468, %v471
        %474 = vbcast.lane.b32.xlu0 %v472, 256
        %v475 = vpop.permute.xlu0 %474
        %s477 = sor.u32 256, 8
        %478 = vbcast.lane.b32.xlu0 %v472, %s477
        %v479 = vpop.permute.xlu0 %478
        %s481 = sor.u32 256, 16
        %482 = vbcast.lane.b32.xlu0 %v472, %s481
        %v483 = vpop.permute.xlu0 %482
        %s485 = sor.u32 256, 24
        %486 = vbcast.lane.b32.xlu0 %v472, %s485
        %v487 = vpop.permute.xlu0 %486
        %v488 = vmul.f32 %v243, %v475
        %v489 = vmul.f32 %v244, %v475
        %v490 = vmul.f32 %v245, %v479
        %v491 = vmul.f32 %v246, %v479
        %v492 = vmul.f32 %v247, %v483
        %v493 = vmul.f32 %v248, %v483
        %v494 = vmul.f32 %v249, %v487
        %v495 = vmul.f32 %v250, %v487
        %496 = vst [vmem:[%s242] sm:$0xff] %v488
        %497 = vst [vmem:[%s242 + $0x8] sm:$0xff] %v489
        %498 = vst [vmem:[%s242 + $0x10] sm:$0xff] %v490
        %499 = vst [vmem:[%s242 + $0x18] sm:$0xff] %v491
        %500 = vst [vmem:[%s242 + $0x20] sm:$0xff] %v492
        %501 = vst [vmem:[%s242 + $0x28] sm:$0xff] %v493
        %502 = vst [vmem:[%s242 + $0x30] sm:$0xff] %v494
        %503 = vst [vmem:[%s242 + $0x38] sm:$0xff] %v495
        %s504 = sand.u32 %s140, 1
        %s505 = scalar_lea.sflag [#allocation4], %s504
        %s506 = sand.u32 %s140, 1
        %s507 = smul.addr %s506, 64
        %s508 = scalar_lea.vmem [#allocation5], %s507
        // Predicated region
        $region45: #{tpu_custom_call.1} parent=39 // pred_check
          %p509 = pneg %p150
        $region46: #{tpu_custom_call.1} parent=39 // pred_check_branch
          %511 = sbr.rel (%p509) target = $region48
        $region47: #{tpu_custom_call.1} parent=39 // pred_region
          %s513 = ssub.s32 1024, 1024
          %514 = vsyncadd %s505, %s513
          %s515 = smul.addr %s22, 8
          %s516 = smul.addr %s515, 128
          %s517 = scalar_lea.hbm %s5, %s516
          %s518 = sshll.u32 %s508, 4
          %s519 = int_to_ptr.vmem [resolvable:$true] %s518
          %524 = dma.vmem_to_hbm [thread:$0]  %s519, 1024, %s517, %s505, 256, 256, 16
        $region48: #{tpu_custom_call.1} parent=39 // pred_fallthru
          _
      $region40: #{tpu_custom_call.1} parent=5 // pred_fallthru
        _
      %p525 = scmp.le.s32.totalorder 2, %s17
      // Predicated region
      $region49: #{tpu_custom_call.1} parent=5 // pred_check
        %p526 = pneg %p525
      $region50: #{tpu_custom_call.1} parent=5 // pred_check_branch
        %528 = sbr.rel (%p526) target = $region52
      $region51: #{tpu_custom_call.1} parent=5 // pred_region
        %s529 = ssub.s32 %s17, 2
        // Predicated region
        $region53: #{tpu_custom_call.1} parent=51 // pred_check
          %p530 = pneg %p156
        $region54: #{tpu_custom_call.1} parent=51 // pred_check_branch
          %532 = sbr.rel (%p530) target = $region56
        $region55: #{tpu_custom_call.1} parent=51 // pred_region
          %s533 = sand.u32 %s141, 1
          %s534 = scalar_lea.sflag [#allocation4], %s533
          %s535 = sand.u32 %s141, 1
          %s536 = smul.addr %s535, 64
          %s537 = scalar_lea.vmem [#allocation5], %s536
          %538 = dma.done %s534, 1024
        $region56: #{tpu_custom_call.1} parent=51 // pred_fallthru
          _
      $region52: #{tpu_custom_call.1} parent=5 // pred_fallthru
        _
    $region6: #{tpu_custom_call.1} parent=1 // loop_footer
      %s21 = sadd.s32 1, %s17
    $region7: #{tpu_custom_call.1} parent=1 // loop_footer_branch
      %16 = sbr.rel target = $region3
    $region8: #{tpu_custom_call.1} parent=1 // loop_exit
      _
    %539 = vsyncpa [#allocation3], 1
    %s540 = scalar_lea.sflag [#allocation3], 1
    %541 = vsyncpa %s540, 1
    %542 = vsyncpa [#allocation4], 1
    %s543 = scalar_lea.sflag [#allocation4], 1
    %544 = vsyncpa %s543, 1

</llo_original>
